<compile_context>
chip_gen: v6e
topology: v6e:2x2x1
jax: 0.10.0
libtpu: 0.0.40
codegen_flags: <defaults>
</compile_context>

<pallas_src>
import math

import jax
import jax.numpy as jnp
from jax.experimental import pallas as pl
from jax.experimental.pallas import tpu as pltpu


def _round_up(x, m):
    return (x + m - 1) // m * m


# ----------------------------------------------------------------------------
# Pallas kernel (one (batch, T-tile) step per grid point)
# ----------------------------------------------------------------------------
def make_kernel(*, ks, C, TQ, Tp, outc, modulation, compute_dtype=jnp.float32):
    """ks = deformable kernel size (= #offsets), TQ = temporal tile width,
    Tp = T + 2 (torch zero-padded length, used as the clip bound)."""

    def kernel(*refs):
        if modulation:
            x_ref, xs_ref, pw_ref, pb_ref, cw_ref, mw_ref, mb_ref, o_ref = refs
        else:
            x_ref, xs_ref, pw_ref, pb_ref, cw_ref, o_ref = refs

        t0 = pl.program_id(1) * TQ                       # tile start (output coords)

        # --- offset head: Conv1d(C, ks, 3, pad=1), the 3 taps fused into 1 matmul.
        # xs_ref holds the three shifted tap slabs stacked on the channel axis
        # (prepared lane-aligned in the wrapper).
        xs = xs_ref[...]                                 # (3C, TQ)
        off = pb_ref[...] + jnp.dot(pw_ref[...], xs,
                                    preferred_element_type=jnp.float32)   # (ks, TQ)
        if modulation:
            m = jax.nn.sigmoid(
                mb_ref[...] + jnp.dot(mw_ref[...], xs,
                                      preferred_element_type=jnp.float32))

        # --- sampling positions p = p_0 + p_n + offset  (padded coords, stride 1)
        l_i = jax.lax.broadcasted_iota(jnp.int32, (ks, TQ), 1).astype(jnp.float32)
        k_i = jax.lax.broadcasted_iota(jnp.int32, (ks, TQ), 0).astype(jnp.float32)
        p = (t0.astype(jnp.float32) + l_i + 1.0) + (k_i - float((ks - 1) // 2)) + off

        q_l = jnp.floor(p)
        q_r = q_l + 1.0
        q_l = jnp.clip(q_l, 0.0, float(Tp - 1))
        q_r = jnp.clip(q_r, 0.0, float(Tp - 1))
        pc = jnp.clip(p, 0.0, float(Tp - 1))
        g_l = pc - q_l                                   # weight for x[q_r]
        g_r = q_r - pc                                   # weight for x[q_l]
        if modulation:
            # fold the modulation into the small (ks, TQ) interpolation weights
            # instead of multiplying the dense (Sp, TQ) one-hot slab.
            g_l = g_l * m
            g_r = g_r * m
        ql_i = q_l.astype(jnp.int32)
        qr_i = q_r.astype(jnp.int32)

        # --- gather + linear interp as weighted-one-hot matmuls + final Conv1d(stride=ks)
        x = x_ref[...]                                   # (C, Sp), zero beyond T+1
        Sp = x_ref.shape[1]
        if compute_dtype != jnp.float32:
            x = x.astype(compute_dtype)
            g_l = g_l.astype(compute_dtype)
            g_r = g_r.astype(compute_dtype)
        s_iota = jax.lax.broadcasted_iota(jnp.int32, (Sp, TQ), 0)   # hoisted out of k-loop

        out = None
        for k in range(ks):                              # ks is static -> unrolled
            # S[s, t] = g_r * [s == q_l]  else  g_l * [s == q_r]  else  0
            # nested select (2 cmp + 2 sel per dense element); exact because whenever
            # clipping makes q_l == q_r both weights are zero.
            S = jnp.where(s_iota == ql_i[k:k + 1, :], g_r[k:k + 1, :],
                          jnp.where(s_iota == qr_i[k:k + 1, :], g_l[k:k + 1, :], 0.0))
            xoff_k = jnp.dot(x, S, preferred_element_type=jnp.float32)        # (C, TQ)
            contrib = jnp.dot(cw_ref[k], xoff_k,
                              preferred_element_type=jnp.float32)             # (outc, TQ)
            out = contrib if out is None else out + contrib

        o_ref[...] = out.astype(o_ref.dtype)

    return kernel


# ----------------------------------------------------------------------------
# Wrapper
# ----------------------------------------------------------------------------
def deform_conv1d(x, params, *, kernel_size=3, padding=1, stride=1,
                  modulation=False, tq=256, compute_dtype=jnp.float32):
    """x: (B, C, T) float32.  Returns (B, outc, T) float32.

    tq: temporal tile width (rounded to a multiple of 128).  256 fits the default
    scoped-VMEM limits on all chips at head-sized C; sweep up to 512 (with
    vmem_limit_bytes raised) on v5e/v6e, and re-derive for v7x's 64 MiB VMEM.
    """
    assert kernel_size == 3 and padding == 1 and stride == 1, \
        "only the module's default configuration is implemented"
    ks = kernel_size
    B, C, T = x.shape
    outc = params["conv_w"].shape[0]
    Tp = T + 2                                   # torch zero-padded length (clip bound)

    TQ = max(128, min(_round_up(tq, 128), _round_up(T, 128)))
    T_pad = _round_up(T, TQ)
    nT = T_pad // TQ
    Sp = _round_up(Tp, 128)                      # lane-aligned gather source axis (>= T+2)

    # Zero-padded, lane-aligned source slab in padded coordinates: slab[..., s] == x[..., s-1].
    x_src = jnp.zeros((B, C, Sp), jnp.float32).at[:, :, 1:T + 1].set(x.astype(jnp.float32))
    # Offset-head tap slabs (tap j at output position t reads x_pad[..., t + j]); stacking them
    # on the channel axis here keeps every kernel block lane-aligned and fuses the 3-tap conv
    # into a single in-kernel matmul.  Built from a separate (T_pad + 2) pad so it is decoupled
    # from Sp (which only has to cover the clipped gather range T+2).
    x_head = jnp.zeros((B, C, T_pad + 2), jnp.float32).at[:, :, 1:T + 1].set(x.astype(jnp.float32))
    xs_all = jnp.concatenate([x_head[:, :, j:j + T_pad] for j in range(3)], axis=1)  # (B, 3C, T_pad)

    pw_flat = jnp.transpose(params["p_w"], (0, 2, 1)).reshape(ks, 3 * C).astype(jnp.float32)
    pb = params["p_b"].reshape(ks, 1).astype(jnp.float32)
    cw = jnp.transpose(params["conv_w"], (2, 0, 1)).astype(jnp.float32)      # (ks, outc, C)

    inputs = [x_src, xs_all, pw_flat, pb, cw]
    in_specs = [
        pl.BlockSpec((None, C, Sp), lambda b, t: (b, 0, 0)),     # full source slab, resident per b
        pl.BlockSpec((None, 3 * C, TQ), lambda b, t: (b, 0, t)), # per-tile tap slab
        pl.BlockSpec((ks, 3 * C), lambda b, t: (0, 0)),
        pl.BlockSpec((ks, 1), lambda b, t: (0, 0)),
        pl.BlockSpec((ks, outc, C), lambda b, t: (0, 0, 0)),
    ]
    if modulation:
        mw_flat = jnp.transpose(params["m_w"], (0, 2, 1)).reshape(ks, 3 * C).astype(jnp.float32)
        mb = params["m_b"].reshape(ks, 1).astype(jnp.float32)
        inputs += [mw_flat, mb]
        in_specs += [
            pl.BlockSpec((ks, 3 * C), lambda b, t: (0, 0)),
            pl.BlockSpec((ks, 1), lambda b, t: (0, 0)),
        ]

    kernel = make_kernel(ks=ks, C=C, TQ=TQ, Tp=Tp, outc=outc,
                         modulation=modulation, compute_dtype=compute_dtype)
    out = pl.pallas_call(
        kernel,
        out_shape=jax.ShapeDtypeStruct((B, outc, T_pad), jnp.float32),
        grid=(B, nT),
        in_specs=in_specs,
        out_specs=pl.BlockSpec((None, outc, TQ), lambda b, t: (b, 0, t)),
        compiler_params=pltpu.CompilerParams(
            dimension_semantics=("parallel", "parallel")),
    )(*inputs)
    return out[:, :, :T]


# ----------------------------------------------------------------------------
# Pure-JAX reference (mirrors the PyTorch forward) for verification
# ----------------------------------------------------------------------------
def ref_deform_conv1d(x, params, *, kernel_size=3, modulation=False):
    ks = kernel_size
    B, C, T = x.shape
    Tp = T + 2
    HP = jax.lax.Precision.HIGHEST
    x_pad = jnp.pad(x, ((0, 0), (0, 0), (1, 1)))

    def head(w, b):  # Conv1d(C, ks, kernel=3, pad=1)
        o = b[None, :, None]
        for j in range(3):
            o = o + jnp.einsum("nc,bct->bnt", w[:, :, j], x_pad[:, :, j:j + T],
                               precision=HP)
        return o

    off = head(params["p_w"], params["p_b"])                      # (B, ks, T)
    if modulation:
        m = jax.nn.sigmoid(head(params["m_w"], params["m_b"]))
        m = jnp.transpose(m, (0, 2, 1))                           # (B, T, ks)

    p_0 = jnp.arange(1, T + 1, dtype=jnp.float32)
    p_n = jnp.arange(-(ks - 1) // 2, (ks - 1) // 2 + 1, dtype=jnp.float32)
    p = p_0[None, None, :] + p_n[None, :, None] + off             # (B, ks, T)
    p = jnp.transpose(p, (0, 2, 1))                               # (B, T, ks)

    q_l = jnp.floor(p)
    q_r = q_l + 1.0
    q_l = jnp.clip(q_l, 0, Tp - 1)
    q_r = jnp.clip(q_r, 0, Tp - 1)
    p = jnp.clip(p, 0, Tp - 1)
    g_l = p - q_l
    g_r = q_r - p
    il = q_l.astype(jnp.int32)
    ir = q_r.astype(jnp.int32)

    gather = jax.vmap(lambda xp, idx: xp[:, idx])                 # (C,Tp),(T,ks)->(C,T,ks)
    x_q_l = gather(x_pad, il)
    x_q_r = gather(x_pad, ir)
    x_off = g_r[:, None, :, :] * x_q_l + g_l[:, None, :, :] * x_q_r
    if modulation:
        x_off = x_off * m[:, None, :, :]
    # final Conv1d(inc, outc, kernel=ks, stride=ks, bias=None) on (B, C, T*ks)
    return jnp.einsum("ock,bctk->bot", params["conv_w"], x_off, precision=HP)


# ----------------------------------------------------------------------------
if __name__ == "__main__":
    KS = 3
    configs = [
        dict(B=2, C=4, T=16, OUTC=8, tq=256),     # tiny, single T-tile
        dict(B=2, C=8, T=200, OUTC=16, tq=128),   # exercises multi-tile grid (2 T-tiles) + padding
    ]
    for cfg in configs:
        B, C, T, OUTC, tq = cfg["B"], cfg["C"], cfg["T"], cfg["OUTC"], cfg["tq"]
        key = jax.random.PRNGKey(0)
        k1, k2, k3, k4, k5, k6 = jax.random.split(key, 6)

        x = jax.random.normal(k1, (B, C, T), jnp.float32)
        bound = 1.0 / math.sqrt(C * KS)
        # Note: the module inits p_conv/m_conv weights to 0; use small non-zero
        # values so the data-dependent offset path is actually exercised.
        params = dict(
            conv_w=jax.random.uniform(k2, (OUTC, C, KS), jnp.float32, -bound, bound),
            p_w=0.05 * jax.random.normal(k3, (KS, C, 3), jnp.float32),
            p_b=0.3 * jax.random.normal(k4, (KS,), jnp.float32),
            m_w=0.05 * jax.random.normal(k5, (KS, C, 3), jnp.float32),
            m_b=0.3 * jax.random.normal(k6, (KS,), jnp.float32),
        )

        for modulation in (False, True):
            out = deform_conv1d(x, params, modulation=modulation, tq=tq)
            out = jax.block_until_ready(out)
            assert out.shape == (B, OUTC, T) and out.dtype == jnp.float32
            ref = ref_deform_conv1d(x, params, modulation=modulation)
            max_err = float(jnp.max(jnp.abs(out - ref)))
            if max_err > 1e-3:
                raise AssertionError(
                    f"mismatch vs reference (T={T}, modulation={modulation}): {max_err}")

    print("KERNEL_OK")
</pallas_src>

<mosaic_0001>
module attributes {stable_mosaic.version = 11 : i64} {
  func.func @kernel(%arg0: i32, %arg1: i32, %arg2: memref<1x4x128xf32, #tpu.memory_space<vmem>>, %arg3: memref<1x12x128xf32, #tpu.memory_space<vmem>>, %arg4: memref<3x12xf32, #tpu.memory_space<vmem>>, %arg5: memref<3x1xf32, #tpu.memory_space<vmem>>, %arg6: memref<3x8x4xf32, #tpu.memory_space<vmem>>, %arg7: memref<1x8x128xf32, #tpu.memory_space<vmem>>) attributes {dimension_semantics = [#tpu.dimension_semantics<parallel>, #tpu.dimension_semantics<parallel>], iteration_bounds = array<i64: 2, 1>, scalar_prefetch = 0 : i64, scratch_operands = 0 : i64, tpu.core_type = #tpu.core_type<tc>, window_params = [{transform_indices = @transform_0, window_bounds = array<i64: 1, 4, 128>}, {transform_indices = @transform_1, window_bounds = array<i64: 1, 12, 128>}, {pipeline_mode = #tpu.pipeline_mode<synchronous>, transform_indices = @transform_2, window_bounds = array<i64: 3, 12>}, {pipeline_mode = #tpu.pipeline_mode<synchronous>, transform_indices = @transform_3, window_bounds = array<i64: 3, 1>}, {pipeline_mode = #tpu.pipeline_mode<synchronous>, transform_indices = @transform_4, window_bounds = array<i64: 3, 8, 4>}, {transform_indices = @transform_5, window_bounds = array<i64: 1, 8, 128>}]} {
    %c128_i32 = arith.constant 128 : i32
    %0 = arith.muli %arg1, %c128_i32 : i32
    %c0 = arith.constant 0 : index
    %c0_0 = arith.constant 0 : index
    %c0_1 = arith.constant 0 : index
    %1 = vector.load %arg3[%c0, %c0_0, %c0_1] : memref<1x12x128xf32, #tpu.memory_space<vmem>>, vector<1x12x128xf32>
    %2 = vector.shape_cast %1 : vector<1x12x128xf32> to vector<12x128xf32>
    %c0_2 = arith.constant 0 : index
    %c0_3 = arith.constant 0 : index
    %3 = vector.load %arg5[%c0_2, %c0_3] : memref<3x1xf32, #tpu.memory_space<vmem>>, vector<3x1xf32>
    %c0_4 = arith.constant 0 : index
    %c0_5 = arith.constant 0 : index
    %4 = vector.load %arg4[%c0_4, %c0_5] : memref<3x12xf32, #tpu.memory_space<vmem>>, vector<3x12xf32>
    %cst = arith.constant dense<0.000000e+00> : vector<3x128xf32>
    %5 = tpu.matmul %4, %2, %cst {dimension_numbers = #tpu.dot_dimension_numbers<[1], [0], [0], [1], [0, 0, 1, 1], [], []>} : vector<3x12xf32>, vector<12x128xf32>, vector<3x128xf32> -> vector<3x128xf32>
    %6 = vector.broadcast %3 : vector<3x1xf32> to vector<3x128xf32>
    %7 = arith.addf %6, %5 : vector<3x128xf32>
    %8 = tpu.iota {dimensions = array<i32: 1>} : vector<3x128xi32>
    %9 = arith.sitofp %8 : vector<3x128xi32> to vector<3x128xf32>
    %10 = tpu.iota {dimensions = array<i32: 0>} : vector<3x128xi32>
    %11 = arith.sitofp %10 : vector<3x128xi32> to vector<3x128xf32>
    %12 = arith.sitofp %0 : i32 to f32
    %13 = vector.broadcast %12 : f32 to vector<3x128xf32>
    %14 = arith.addf %13, %9 : vector<3x128xf32>
    %cst_6 = arith.constant 1.000000e+00 : f32
    %15 = vector.broadcast %cst_6 : f32 to vector<3x128xf32>
    %16 = arith.addf %14, %15 : vector<3x128xf32>
    %cst_7 = arith.constant 1.000000e+00 : f32
    %17 = vector.broadcast %cst_7 : f32 to vector<3x128xf32>
    %18 = arith.subf %11, %17 : vector<3x128xf32>
    %19 = arith.addf %16, %18 : vector<3x128xf32>
    %20 = arith.addf %19, %7 : vector<3x128xf32>
    %21 = math.floor %20 : vector<3x128xf32>
    %cst_8 = arith.constant 1.000000e+00 : f32
    %22 = vector.broadcast %cst_8 : f32 to vector<3x128xf32>
    %23 = arith.addf %21, %22 : vector<3x128xf32>
    %cst_9 = arith.constant 0.000000e+00 : f32
    %cst_10 = arith.constant 1.700000e+01 : f32
    %24 = vector.broadcast %cst_9 : f32 to vector<3x128xf32>
    %25 = arith.maximumf %24, %21 : vector<3x128xf32>
    %26 = vector.broadcast %cst_10 : f32 to vector<3x128xf32>
    %27 = arith.minimumf %26, %25 : vector<3x128xf32>
    %cst_11 = arith.constant 0.000000e+00 : f32
    %cst_12 = arith.constant 1.700000e+01 : f32
    %28 = vector.broadcast %cst_11 : f32 to vector<3x128xf32>
    %29 = arith.maximumf %28, %23 : vector<3x128xf32>
    %30 = vector.broadcast %cst_12 : f32 to vector<3x128xf32>
    %31 = arith.minimumf %30, %29 : vector<3x128xf32>
    %cst_13 = arith.constant 0.000000e+00 : f32
    %cst_14 = arith.constant 1.700000e+01 : f32
    %32 = vector.broadcast %cst_13 : f32 to vector<3x128xf32>
    %33 = arith.maximumf %32, %20 : vector<3x128xf32>
    %34 = vector.broadcast %cst_14 : f32 to vector<3x128xf32>
    %35 = arith.minimumf %34, %33 : vector<3x128xf32>
    %36 = arith.subf %35, %27 : vector<3x128xf32>
    %37 = arith.subf %31, %35 : vector<3x128xf32>
    %38 = arith.fptosi %27 : vector<3x128xf32> to vector<3x128xi32>
    %39 = arith.fptosi %31 : vector<3x128xf32> to vector<3x128xi32>
    %c0_15 = arith.constant 0 : index
    %c0_16 = arith.constant 0 : index
    %c0_17 = arith.constant 0 : index
    %40 = vector.load %arg2[%c0_15, %c0_16, %c0_17] : memref<1x4x128xf32, #tpu.memory_space<vmem>>, vector<1x4x128xf32>
    %41 = vector.shape_cast %40 : vector<1x4x128xf32> to vector<4x128xf32>
    %42 = tpu.iota {dimensions = array<i32: 0>} : vector<128x128xi32>
    %43 = vector.extract_strided_slice %38 {offsets = [0, 0], sizes = [1, 128], strides = [1, 1]} : vector<3x128xi32> to vector<1x128xi32>
    %44 = vector.broadcast %43 : vector<1x128xi32> to vector<128x128xi32>
    %45 = arith.cmpi eq, %42, %44 : vector<128x128xi32>
    %46 = vector.extract_strided_slice %37 {offsets = [0, 0], sizes = [1, 128], strides = [1, 1]} : vector<3x128xf32> to vector<1x128xf32>
    %47 = vector.extract_strided_slice %39 {offsets = [0, 0], sizes = [1, 128], strides = [1, 1]} : vector<3x128xi32> to vector<1x128xi32>
    %48 = vector.broadcast %47 : vector<1x128xi32> to vector<128x128xi32>
    %49 = arith.cmpi eq, %42, %48 : vector<128x128xi32>
    %50 = vector.extract_strided_slice %36 {offsets = [0, 0], sizes = [1, 128], strides = [1, 1]} : vector<3x128xf32> to vector<1x128xf32>
    %cst_18 = arith.constant 0.000000e+00 : f32
    %51 = vector.shape_cast %50 : vector<1x128xf32> to vector<1x128xf32>
    %52 = vector.broadcast %51 : vector<1x128xf32> to vector<128x128xf32>
    %53 = vector.broadcast %cst_18 : f32 to vector<128x128xf32>
    %54 = arith.select %49, %52, %53 : vector<128x128xi1>, vector<128x128xf32>
    %55 = vector.shape_cast %46 : vector<1x128xf32> to vector<1x128xf32>
    %56 = vector.broadcast %55 : vector<1x128xf32> to vector<128x128xf32>
    %57 = arith.select %45, %56, %54 : vector<128x128xi1>, vector<128x128xf32>
    %cst_19 = arith.constant dense<0.000000e+00> : vector<4x128xf32>
    %58 = tpu.matmul %41, %57, %cst_19 {dimension_numbers = #tpu.dot_dimension_numbers<[1], [0], [0], [1], [0, 0, 1, 1], [], []>} : vector<4x128xf32>, vector<128x128xf32>, vector<4x128xf32> -> vector<4x128xf32>
    %c0_20 = arith.constant 0 : index
    %c0_21 = arith.constant 0 : index
    %c0_22 = arith.constant 0 : index
    %59 = vector.load %arg6[%c0_20, %c0_21, %c0_22] : memref<3x8x4xf32, #tpu.memory_space<vmem>>, vector<1x8x4xf32>
    %60 = vector.shape_cast %59 : vector<1x8x4xf32> to vector<8x4xf32>
    %cst_23 = arith.constant dense<0.000000e+00> : vector<8x128xf32>
    %61 = tpu.matmul %60, %58, %cst_23 {dimension_numbers = #tpu.dot_dimension_numbers<[1], [0], [0], [1], [0, 0, 1, 1], [], []>} : vector<8x4xf32>, vector<4x128xf32>, vector<8x128xf32> -> vector<8x128xf32>
    %62 = vector.extract_strided_slice %38 {offsets = [1, 0], sizes = [1, 128], strides = [1, 1]} : vector<3x128xi32> to vector<1x128xi32>
    %63 = vector.broadcast %62 : vector<1x128xi32> to vector<128x128xi32>
    %64 = arith.cmpi eq, %42, %63 : vector<128x128xi32>
    %65 = vector.extract_strided_slice %37 {offsets = [1, 0], sizes = [1, 128], strides = [1, 1]} : vector<3x128xf32> to vector<1x128xf32>
    %66 = vector.extract_strided_slice %39 {offsets = [1, 0], sizes = [1, 128], strides = [1, 1]} : vector<3x128xi32> to vector<1x128xi32>
    %67 = vector.broadcast %66 : vector<1x128xi32> to vector<128x128xi32>
    %68 = arith.cmpi eq, %42, %67 : vector<128x128xi32>
    %69 = vector.extract_strided_slice %36 {offsets = [1, 0], sizes = [1, 128], strides = [1, 1]} : vector<3x128xf32> to vector<1x128xf32>
    %cst_24 = arith.constant 0.000000e+00 : f32
    %70 = vector.shape_cast %69 : vector<1x128xf32> to vector<1x128xf32>
    %71 = vector.broadcast %70 : vector<1x128xf32> to vector<128x128xf32>
    %72 = vector.broadcast %cst_24 : f32 to vector<128x128xf32>
    %73 = arith.select %68, %71, %72 : vector<128x128xi1>, vector<128x128xf32>
    %74 = vector.shape_cast %65 : vector<1x128xf32> to vector<1x128xf32>
    %75 = vector.broadcast %74 : vector<1x128xf32> to vector<128x128xf32>
    %76 = arith.select %64, %75, %73 : vector<128x128xi1>, vector<128x128xf32>
    %cst_25 = arith.constant dense<0.000000e+00> : vector<4x128xf32>
    %77 = tpu.matmul %41, %76, %cst_25 {dimension_numbers = #tpu.dot_dimension_numbers<[1], [0], [0], [1], [0, 0, 1, 1], [], []>} : vector<4x128xf32>, vector<128x128xf32>, vector<4x128xf32> -> vector<4x128xf32>
    %c1 = arith.constant 1 : index
    %c0_26 = arith.constant 0 : index
    %c0_27 = arith.constant 0 : index
    %78 = vector.load %arg6[%c1, %c0_26, %c0_27] : memref<3x8x4xf32, #tpu.memory_space<vmem>>, vector<1x8x4xf32>
    %79 = vector.shape_cast %78 : vector<1x8x4xf32> to vector<8x4xf32>
    %cst_28 = arith.constant dense<0.000000e+00> : vector<8x128xf32>
    %80 = tpu.matmul %79, %77, %cst_28 {dimension_numbers = #tpu.dot_dimension_numbers<[1], [0], [0], [1], [0, 0, 1, 1], [], []>} : vector<8x4xf32>, vector<4x128xf32>, vector<8x128xf32> -> vector<8x128xf32>
    %81 = arith.addf %61, %80 : vector<8x128xf32>
    %82 = vector.extract_strided_slice %38 {offsets = [2, 0], sizes = [1, 128], strides = [1, 1]} : vector<3x128xi32> to vector<1x128xi32>
    %83 = vector.broadcast %82 : vector<1x128xi32> to vector<128x128xi32>
    %84 = arith.cmpi eq, %42, %83 : vector<128x128xi32>
    %85 = vector.extract_strided_slice %37 {offsets = [2, 0], sizes = [1, 128], strides = [1, 1]} : vector<3x128xf32> to vector<1x128xf32>
    %86 = vector.extract_strided_slice %39 {offsets = [2, 0], sizes = [1, 128], strides = [1, 1]} : vector<3x128xi32> to vector<1x128xi32>
    %87 = vector.broadcast %86 : vector<1x128xi32> to vector<128x128xi32>
    %88 = arith.cmpi eq, %42, %87 : vector<128x128xi32>
    %89 = vector.extract_strided_slice %36 {offsets = [2, 0], sizes = [1, 128], strides = [1, 1]} : vector<3x128xf32> to vector<1x128xf32>
    %cst_29 = arith.constant 0.000000e+00 : f32
    %90 = vector.shape_cast %89 : vector<1x128xf32> to vector<1x128xf32>
    %91 = vector.broadcast %90 : vector<1x128xf32> to vector<128x128xf32>
    %92 = vector.broadcast %cst_29 : f32 to vector<128x128xf32>
    %93 = arith.select %88, %91, %92 : vector<128x128xi1>, vector<128x128xf32>
    %94 = vector.shape_cast %85 : vector<1x128xf32> to vector<1x128xf32>
    %95 = vector.broadcast %94 : vector<1x128xf32> to vector<128x128xf32>
    %96 = arith.select %84, %95, %93 : vector<128x128xi1>, vector<128x128xf32>
    %cst_30 = arith.constant dense<0.000000e+00> : vector<4x128xf32>
    %97 = tpu.matmul %41, %96, %cst_30 {dimension_numbers = #tpu.dot_dimension_numbers<[1], [0], [0], [1], [0, 0, 1, 1], [], []>} : vector<4x128xf32>, vector<128x128xf32>, vector<4x128xf32> -> vector<4x128xf32>
    %c2 = arith.constant 2 : index
    %c0_31 = arith.constant 0 : index
    %c0_32 = arith.constant 0 : index
    %98 = vector.load %arg6[%c2, %c0_31, %c0_32] : memref<3x8x4xf32, #tpu.memory_space<vmem>>, vector<1x8x4xf32>
    %99 = vector.shape_cast %98 : vector<1x8x4xf32> to vector<8x4xf32>
    %cst_33 = arith.constant dense<0.000000e+00> : vector<8x128xf32>
    %100 = tpu.matmul %99, %97, %cst_33 {dimension_numbers = #tpu.dot_dimension_numbers<[1], [0], [0], [1], [0, 0, 1, 1], [], []>} : vector<8x4xf32>, vector<4x128xf32>, vector<8x128xf32> -> vector<8x128xf32>
    %101 = arith.addf %81, %100 : vector<8x128xf32>
    %c0_34 = arith.constant 0 : index
    %c0_35 = arith.constant 0 : index
    %c0_36 = arith.constant 0 : index
    %102 = vector.load %arg7[%c0_34, %c0_35, %c0_36] : memref<1x8x128xf32, #tpu.memory_space<vmem>>, vector<1x8x128xf32>
    %103 = vector.shape_cast %102 : vector<1x8x128xf32> to vector<8x128xf32>
    %104 = vector.shape_cast %101 : vector<8x128xf32> to vector<1x8x128xf32>
    tpu.vector_store %arg7[%c0_34, %c0_35, %c0_36], %104 {strides = array<i32>} : memref<1x8x128xf32, #tpu.memory_space<vmem>>, vector<1x8x128xf32>,
    return
  }
  func.func @transform_0(%arg0: i32, %arg1: i32) -> (i32, i32, i32) {
    %c0_i32 = arith.constant 0 : i32
    %c0_i32_0 = arith.constant 0 : i32
    %c0_i32_1 = arith.constant 0 : i32
    return %arg0, %c0_i32, %c0_i32_0 : i32, i32, i32
  }
  func.func @transform_1(%arg0: i32, %arg1: i32) -> (i32, i32, i32) {
    %c0_i32 = arith.constant 0 : i32
    %c0_i32_0 = arith.constant 0 : i32
    return %arg0, %c0_i32, %arg1 : i32, i32, i32
  }
  func.func @transform_2(%arg0: i32, %arg1: i32) -> (i32, i32) {
    %c0_i32 = arith.constant 0 : i32
    %c0_i32_0 = arith.constant 0 : i32
    %c0_i32_1 = arith.constant 0 : i32
    return %c0_i32, %c0_i32_0 : i32, i32
  }
  func.func @transform_3(%arg0: i32, %arg1: i32) -> (i32, i32) {
    %c0_i32 = arith.constant 0 : i32
    %c0_i32_0 = arith.constant 0 : i32
    %c0_i32_1 = arith.constant 0 : i32
    return %c0_i32, %c0_i32_0 : i32, i32
  }
  func.func @transform_4(%arg0: i32, %arg1: i32) -> (i32, i32, i32) {
    %c0_i32 = arith.constant 0 : i32
    %c0_i32_0 = arith.constant 0 : i32
    %c0_i32_1 = arith.constant 0 : i32
    %c0_i32_2 = arith.constant 0 : i32
    return %c0_i32, %c0_i32_0, %c0_i32_1 : i32, i32, i32
  }
  func.func @transform_5(%arg0: i32, %arg1: i32) -> (i32, i32, i32) {
    %c0_i32 = arith.constant 0 : i32
    %c0_i32_0 = arith.constant 0 : i32
    return %arg0, %c0_i32, %arg1 : i32, i32, i32
  }
}

</mosaic_0001>

<llo_original>
// kernel: tpu_custom_call.1
$region0: #{tpu_custom_call.1}
  #allocation0 [shape = 'u32[]', space=smem, size = 0x4, offset = 0x4, fixed_abs, tag = 'smem constant byte address 0x4 - core index']
  #allocation1 [shape = 'u32[144,128]{1,0:T(1,128)}', space=vmem, size = 0x12000, scoped, tag = 'internal scratch']
  %s0 = inlined_call_operand.vmem [shape: f32[2,4,128], index: 0, kind: input, shape index: {}]
  %s1 = inlined_call_operand.vmem [shape: f32[2,12,128], index: 1, kind: input, shape index: {}]
  %s2 = inlined_call_operand.vmem [shape: f32[3,12], index: 2, kind: input, shape index: {}]
  %s3 = inlined_call_operand.vmem [shape: f32[3,1], index: 3, kind: input, shape index: {}]
  %s4 = inlined_call_operand.vmem [shape: f32[3,8,4], index: 4, kind: input, shape index: {}]
  %s5 = inlined_call_operand.hbm [shape: f32[2,8,128], index: 5, kind: output, shape index: {}]
  %s6 = sld [smem:[#allocation0]]
  $region53: #{tpu_custom_call.1} parent=0
    _
  %s8 = ssub.s32 1, %s6
  %s9 = scalar_select 0, %s8, %s6
  $region1: #{tpu_custom_call.1} parent=0
    #allocation2 [shape = 'u8[8192]{0}', space=vmem, size = 0x2000, scoped, tag = 'output window, operand 0']
    #allocation3 [shape = 's32[2]{0}', space=sflag, size = 0x8, scoped, tag = 'scoped memory for tpu_custom_call.1']
    %10 = vsyncpa [#allocation3], 0
    %s11 = scalar_lea.sflag [#allocation3], 1
    %12 = vsyncpa %s11, 0
    loop: start=0, step=1, limit=4
    $region2: #{tpu_custom_call.1} parent=1 // loop_pre_header
      _
    $region3: #{tpu_custom_call.1} parent=1 // loop_header
      %s14 = sphi 0, %s18
      %p15 = scmp.ge.s32.totalorder %s14, 4
      %s21 = sphi 0, %s33
      %s22 = sphi 0, %s29
      %s23 = sphi 0, %s21
      %s24 = sphi 0, %s22
      %s25 = sphi 0, %s23
      %s26 = sphi 0, %s24
      %s36 = sphi 0, %s38
      %s39 = sphi 0, %s36
      %s40 = sphi 0, %s39
      %s56 = sphi 0, %s40
      %s64 = sphi 0, %s66
      %s67 = sphi 0, %s64
      %s68 = sphi 0, %s67
      %s84 = sphi 0, %s68
      %s88 = sphi 0, %s88
      %s90 = sphi 0, %s88
      %s91 = sphi 0, %s90
      %s105 = sphi 0, %s91
      %s109 = sphi 0, %s109
      %s111 = sphi 0, %s109
      %s112 = sphi 0, %s111
      %s126 = sphi 0, %s112
      %s130 = sphi 0, %s130
      %s132 = sphi 0, %s130
      %s133 = sphi 0, %s132
      %s147 = sphi 0, %s133
      %s155 = sphi 0, %s157
      %s158 = sphi 0, %s155
      %s159 = sphi 0, %s158
      %s175 = sphi 0, %s159
    $region4: #{tpu_custom_call.1} parent=1 // loop_header_branch
      %17 = sbr.rel (%p15) target = $region8
    $region5: #{tpu_custom_call.1} parent=1 // loop_body
      %s19 = ssub.s32 %s14, 1
      %s20 = ssub.s32 %s14, 2
      %s27 = sadd.s32 1, %s22
      %p28 = scmp.ge.s32.totalorder %s27, 1
      %s29 = scalar_select %p28, 0, %s27
      %s30 = sadd.s32 1, %s21
      %s31 = scalar_select %p28, %s30, %s21
      %p32 = scmp.ge.s32.totalorder %s31, 2
      %s33 = scalar_select %p32, 0, %s31
      %s34 = ssub.s32 %s21, %s33
      %p35 = scmp.eq.s32.totalorder %s34, 0
      %s37 = sadd.s32 %s36, 1
      %s38 = scalar_select %p35, %s36, %s37
      %p41 = pneg %p35
      %p42 = scmp.eq.s32.totalorder %s14, 1
      %p43 = por %p41, %p42
      %p44 = scmp.ne.s32.totalorder %s36, %s39
      %p45 = scmp.eq.s32.totalorder %s14, 0
      %p46 = por %p44, %p45
      %p47 = scmp.ne.s32.totalorder %s36, %s39
      %p48 = scmp.eq.s32.totalorder %s19, 1
      %p49 = por %p47, %p48
      %p50 = scmp.ne.s32.totalorder %s39, %s40
      %p51 = scmp.eq.s32.totalorder %s19, 0
      %p52 = por %p50, %p51
      %p53 = scmp.ne.s32.totalorder %s39, %s40
      %p54 = scmp.eq.s32.totalorder %s20, 1
      %p55 = por %p53, %p54
      %p57 = scmp.ne.s32.totalorder %s40, %s56
      %p58 = scmp.eq.s32.totalorder %s20, 0
      %p59 = por %p57, %p58
      %s60 = ssub.s32 %s21, %s33
      %s61 = ssub.s32 %s22, %s29
      %s62 = sor.u32 %s60, %s61
      %p63 = scmp.eq.s32.totalorder %s62, 0
      %s65 = sadd.s32 %s64, 1
      %s66 = scalar_select %p63, %s64, %s65
      %p69 = pneg %p63
      %p70 = scmp.eq.s32.totalorder %s14, 1
      %p71 = por %p69, %p70
      %p72 = scmp.ne.s32.totalorder %s64, %s67
      %p73 = scmp.eq.s32.totalorder %s14, 0
      %p74 = por %p72, %p73
      %p75 = scmp.ne.s32.totalorder %s64, %s67
      %p76 = scmp.eq.s32.totalorder %s19, 1
      %p77 = por %p75, %p76
      %p78 = scmp.ne.s32.totalorder %s67, %s68
      %p79 = scmp.eq.s32.totalorder %s19, 0
      %p80 = por %p78, %p79
      %p81 = scmp.ne.s32.totalorder %s67, %s68
      %p82 = scmp.eq.s32.totalorder %s20, 1
      %p83 = por %p81, %p82
      %p85 = scmp.ne.s32.totalorder %s68, %s84
      %p86 = scmp.eq.s32.totalorder %s20, 0
      %p87 = por %p85, %p86
      %s89 = sadd.s32 %s88, 1
      %p92 = scmp.eq.s32.totalorder %s14, 1
      %p93 = scmp.ne.s32.totalorder %s88, %s90
      %p94 = scmp.eq.s32.totalorder %s14, 0
      %p95 = por %p93, %p94
      %p96 = scmp.ne.s32.totalorder %s88, %s90
      %p97 = scmp.eq.s32.totalorder %s19, 1
      %p98 = por %p96, %p97
      %p99 = scmp.ne.s32.totalorder %s90, %s91
      %p100 = scmp.eq.s32.totalorder %s19, 0
      %p101 = por %p99, %p100
      %p102 = scmp.ne.s32.totalorder %s90, %s91
      %p103 = scmp.eq.s32.totalorder %s20, 1
      %p104 = por %p102, %p103
      %p106 = scmp.ne.s32.totalorder %s91, %s105
      %p107 = scmp.eq.s32.totalorder %s20, 0
      %p108 = por %p106, %p107
      %s110 = sadd.s32 %s109, 1
      %p113 = scmp.eq.s32.totalorder %s14, 1
      %p114 = scmp.ne.s32.totalorder %s109, %s111
      %p115 = scmp.eq.s32.totalorder %s14, 0
      %p116 = por %p114, %p115
      %p117 = scmp.ne.s32.totalorder %s109, %s111
      %p118 = scmp.eq.s32.totalorder %s19, 1
      %p119 = por %p117, %p118
      %p120 = scmp.ne.s32.totalorder %s111, %s112
      %p121 = scmp.eq.s32.totalorder %s19, 0
      %p122 = por %p120, %p121
      %p123 = scmp.ne.s32.totalorder %s111, %s112
      %p124 = scmp.eq.s32.totalorder %s20, 1
      %p125 = por %p123, %p124
      %p127 = scmp.ne.s32.totalorder %s112, %s126
      %p128 = scmp.eq.s32.totalorder %s20, 0
      %p129 = por %p127, %p128
      %s131 = sadd.s32 %s130, 1
      %p134 = scmp.eq.s32.totalorder %s14, 1
      %p135 = scmp.ne.s32.totalorder %s130, %s132
      %p136 = scmp.eq.s32.totalorder %s14, 0
      %p137 = por %p135, %p136
      %p138 = scmp.ne.s32.totalorder %s130, %s132
      %p139 = scmp.eq.s32.totalorder %s19, 1
      %p140 = por %p138, %p139
      %p141 = scmp.ne.s32.totalorder %s132, %s133
      %p142 = scmp.eq.s32.totalorder %s19, 0
      %p143 = por %p141, %p142
      %p144 = scmp.ne.s32.totalorder %s132, %s133
      %p145 = scmp.eq.s32.totalorder %s20, 1
      %p146 = por %p144, %p145
      %p148 = scmp.ne.s32.totalorder %s133, %s147
      %p149 = scmp.eq.s32.totalorder %s20, 0
      %p150 = por %p148, %p149
      %s151 = ssub.s32 %s21, %s33
      %s152 = ssub.s32 %s22, %s29
      %s153 = sor.u32 %s151, %s152
      %p154 = scmp.eq.s32.totalorder %s153, 0
      %s156 = sadd.s32 %s155, 1
      %s157 = scalar_select %p154, %s155, %s156
      %p160 = pneg %p154
      %p161 = scmp.eq.s32.totalorder %s14, 1
      %p162 = por %p160, %p161
      %p163 = scmp.ne.s32.totalorder %s155, %s158
      %p164 = scmp.eq.s32.totalorder %s14, 0
      %p165 = por %p163, %p164
      %p166 = scmp.ne.s32.totalorder %s155, %s158
      %p167 = scmp.eq.s32.totalorder %s19, 1
      %p168 = por %p166, %p167
      %p169 = scmp.ne.s32.totalorder %s158, %s159
      %p170 = scmp.eq.s32.totalorder %s19, 0
      %p171 = por %p169, %p170
      %p172 = scmp.ne.s32.totalorder %s158, %s159
      %p173 = scmp.eq.s32.totalorder %s20, 1
      %p174 = por %p172, %p173
      %p176 = scmp.ne.s32.totalorder %s159, %s175
      %p177 = scmp.eq.s32.totalorder %s20, 0
      %p178 = por %p176, %p177
      %p179 = scmp.le.s32.totalorder 1, %s14
      %p180 = scmp.lt.s32.totalorder %s14, 3
      %p181 = pnand %p179, %p180
      %p182 = pneg %p181
      // Predicated region
      $region9: #{tpu_custom_call.1} parent=5 // pred_check
        _
      $region10: #{tpu_custom_call.1} parent=5 // pred_check_branch
        %184 = sbr.rel (%p181) target = $region12
      $region11: #{tpu_custom_call.1} parent=5 // pred_region
        %s185 = ssub.s32 %s14, 1
        // Predicated region
        $region13: #{tpu_custom_call.1} parent=11 // pred_check
          %p186 = pneg %p101
        $region14: #{tpu_custom_call.1} parent=11 // pred_check_branch
          %188 = sbr.rel (%p186) target = $region16
        $region15: #{tpu_custom_call.1} parent=11 // pred_region
          _
        $region16: #{tpu_custom_call.1} parent=11 // pred_fallthru
          _
        // Predicated region
        $region17: #{tpu_custom_call.1} parent=11 // pred_check
          %p189 = pneg %p122
        $region18: #{tpu_custom_call.1} parent=11 // pred_check_branch
          %191 = sbr.rel (%p189) target = $region20
        $region19: #{tpu_custom_call.1} parent=11 // pred_region
          _
        $region20: #{tpu_custom_call.1} parent=11 // pred_fallthru
          _
        // Predicated region
        $region21: #{tpu_custom_call.1} parent=11 // pred_check
          %p192 = pneg %p143
        $region22: #{tpu_custom_call.1} parent=11 // pred_check_branch
          %194 = sbr.rel (%p192) target = $region24
        $region23: #{tpu_custom_call.1} parent=11 // pred_region
          _
        $region24: #{tpu_custom_call.1} parent=11 // pred_fallthru
          _
      $region12: #{tpu_custom_call.1} parent=5 // pred_fallthru
        _
      %p195 = scmp.lt.s32.totalorder %s14, 2
      // Predicated region
      $region25: #{tpu_custom_call.1} parent=5 // pred_check
        %p196 = pneg %p195
      $region26: #{tpu_custom_call.1} parent=5 // pred_check_branch
        %198 = sbr.rel (%p196) target = $region28
      $region27: #{tpu_custom_call.1} parent=5 // pred_region
        // Predicated region
        $region29: #{tpu_custom_call.1} parent=27 // pred_check
          %p199 = pneg %p46
        $region30: #{tpu_custom_call.1} parent=27 // pred_check_branch
          %201 = sbr.rel (%p199) target = $region32
        $region31: #{tpu_custom_call.1} parent=27 // pred_region
          %p202 = scmp.lt.s32.totalorder %s21, 1
          %s203 = scalar_select %p202, %s21, 1
          %s204 = smul.addr %s203, 4
          %s205 = scalar_lea.vmem %s0, %s204
        $region32: #{tpu_custom_call.1} parent=27 // pred_fallthru
          _
        // Predicated region
        $region33: #{tpu_custom_call.1} parent=27 // pred_check
          %p206 = pneg %p74
        $region34: #{tpu_custom_call.1} parent=27 // pred_check_branch
          %208 = sbr.rel (%p206) target = $region36
        $region35: #{tpu_custom_call.1} parent=27 // pred_region
          %p209 = scmp.lt.s32.totalorder %s21, 1
          %s210 = scalar_select %p209, %s21, 1
          %p211 = scmp.lt.s32.totalorder %s22, 0
          %s212 = scalar_select %p211, %s22, 0
          %s213 = smul.addr %s210, 2
          %s214 = sadd.s32 %s212, %s213
          %s215 = smul.addr %s214, 8
          %s216 = scalar_lea.vmem %s1, %s215
        $region36: #{tpu_custom_call.1} parent=27 // pred_fallthru
          _
      $region28: #{tpu_custom_call.1} parent=5 // pred_fallthru
        _
      %p217 = scmp.le.s32.totalorder 1, %s14
      %p218 = scmp.lt.s32.totalorder %s14, 3
      %p219 = pnand %p217, %p218
      %p220 = pneg %p219
      // Predicated region
      $region37: #{tpu_custom_call.1} parent=5 // pred_check
        _
      $region38: #{tpu_custom_call.1} parent=5 // pred_check_branch
        %222 = sbr.rel (%p219) target = $region40
      $region39: #{tpu_custom_call.1} parent=5 // pred_region
        %s223 = ssub.s32 %s14, 1
        %p224 = scmp.lt.s32.totalorder %s23, 1
        %s225 = scalar_select %p224, %s23, 1
        %s226 = smul.addr %s225, 4
        %s227 = scalar_lea.vmem %s0, %s226
        %p228 = pneg %p52
        %p229 = pneg %p49
        %p230 = scmp.lt.s32.totalorder %s23, 1
        %s231 = scalar_select %p230, %s23, 1
        %p232 = scmp.lt.s32.totalorder %s24, 0
        %s233 = scalar_select %p232, %s24, 0
        %s234 = smul.addr %s231, 2
        %s235 = sadd.s32 %s233, %s234
        %s236 = smul.addr %s235, 8
        %s237 = scalar_lea.vmem %s1, %s236
        %p238 = pneg %p80
        %p239 = pneg %p77
        %p240 = pneg %p101
        %p241 = pneg %p98
        %p242 = pneg %p122
        %p243 = pneg %p119
        %p244 = pneg %p143
        %p245 = pneg %p140
        %p246 = pneg %p171
        %p247 = pneg %p168
        %s248 = sand.u32 %s158, 1
        %s249 = scalar_lea.sflag [#allocation3], %s248
        %s250 = sand.u32 %s158, 1
        %s251 = smul.addr %s250, 8
        %s252 = scalar_lea.vmem [#allocation2], %s251
        %p253 = scmp.lt.s32.totalorder %s23, 1
        %s254 = scalar_select %p253, %s23, 1
        %s255 = smul.addr %s254, 4
        %s256 = scalar_lea.vmem %s0, %s255
        %p257 = scmp.lt.s32.totalorder %s23, 1
        %s258 = scalar_select %p257, %s23, 1
        %p259 = scmp.lt.s32.totalorder %s24, 0
        %s260 = scalar_select %p259, %s24, 0
        %s261 = smul.addr %s258, 2
        %s262 = sadd.s32 %s260, %s261
        %s263 = smul.addr %s262, 8
        %s264 = scalar_lea.vmem %s1, %s263
        %s265 = smul.u32 %s24, 128
        %v266 = vld [vmem:[%s264] sm:$0xff]
        %v267 = vld [vmem:[%s264 + $0x8] sm:$0xf]
        %v268 = vld [vmem:[%s3] sm:$0x7]
        %v269 = vld [vmem:[%s2] sm:$0x7]
        %vm270 = vcmask 97280
        %v272 = vsel %vm270, %v269, 0
        %vm274 = vcmask 1043456
        %v276 = vsel %vm274, %v267, 0
        %278 = vmatprep.subr.mxu0 0.0
        %279 = vmatpush1.msra.mxu0 0.0
        %280 = vmatprep.subr.mxu0 0.0
        %281 = vmatpush1.msra.mxu0 0.0
        %282 = vmatprep.subr.mxu0 0.0
        %283 = vmatpush1.msra.mxu0 0.0
        %284 = vmatprep.subr.mxu0 0.0
        %285 = vmatpush1.msra.mxu0 0.0
        %286 = vmatprep.subr.mxu0 0.0
        %287 = vmatpush1.msra.mxu0 0.0
        %288 = vmatprep.subr.mxu0 0.0
        %289 = vmatpush1.msra.mxu0 0.0
        %290 = vmatprep.subr.mxu0 0.0
        %291 = vmatpush1.msra.mxu0 0.0
        %292 = vmatprep.subr.mxu0 0.0
        %293 = vmatpush1.msra.mxu0 0.0
        %294 = vmatprep.subr.mxu0 0.0
        %295 = vmatpush1.msra.mxu0 0.0
        %296 = vmatprep.subr.mxu0 0.0
        %297 = vmatpush1.msra.mxu0 0.0
        %298 = vmatprep.subr.mxu0 0.0
        %299 = vmatpush1.msra.mxu0 0.0
        %300 = vmatprep.subr.mxu0 0.0
        %301 = vmatpush1.msra.mxu0 0.0
        %302 = vmatprep.subr.mxu0 0.0
        %303 = vmatpush1.msra.mxu0 0.0
        %304 = vmatprep.subr.mxu0 0.0
        %305 = vmatpush1.msra.mxu0 0.0
        %306 = vmatprep.subr.mxu0 0.0
        %307 = vmatpush1.msra.mxu0 %v276
        %308 = vmatprep.subr.mxu0 0.0
        %309 = vmatpush1.msra.mxu0 %v266
        %310 = vmatprep.subr.mxu0 0.0
        %311 = vmatpush2.msra.mxu0 0.0
        %312 = vmatprep.subr.mxu0 0.0
        %313 = vmatpush2.msra.mxu0 0.0
        %314 = vmatprep.subr.mxu0 0.0
        %315 = vmatpush2.msra.mxu0 0.0
        %316 = vmatprep.subr.mxu0 0.0
        %317 = vmatpush2.msra.mxu0 0.0
        %318 = vmatprep.subr.mxu0 0.0
        %319 = vmatpush2.msra.mxu0 0.0
        %320 = vmatprep.subr.mxu0 0.0
        %321 = vmatpush2.msra.mxu0 0.0
        %322 = vmatprep.subr.mxu0 0.0
        %323 = vmatpush2.msra.mxu0 0.0
        %324 = vmatprep.subr.mxu0 0.0
        %325 = vmatpush2.msra.mxu0 0.0
        %326 = vmatprep.subr.mxu0 0.0
        %327 = vmatpush2.msra.mxu0 0.0
        %328 = vmatprep.subr.mxu0 0.0
        %329 = vmatpush2.msra.mxu0 0.0
        %330 = vmatprep.subr.mxu0 0.0
        %331 = vmatpush2.msra.mxu0 0.0
        %332 = vmatprep.subr.mxu0 0.0
        %333 = vmatpush2.msra.mxu0 0.0
        %334 = vmatprep.subr.mxu0 0.0
        %335 = vmatpush2.msra.mxu0 0.0
        %336 = vmatprep.subr.mxu0 0.0
        %337 = vmatpush2.msra.mxu0 0.0
        %338 = vmatprep.subr.mxu0 0.0
        %339 = vmatpush2.msra.mxu0 0.0
        %340 = vmatprep.subr.mxu0 0.0
        %341 = vmatpush2.msra.mxu0 0.0
        %342 = vmatprep.mubr.f32.mxu0 0.0
        %343 = vmatmul.mubr.f32.gmra.mxu0 %v272
        %v344 = vpop.f32.mrf.mxu0
        %v345 = vadd.f32 0.0, %v344
        %v346 = vpop.f32.mrf.mxu0
        %347 = vdwg.mxu0
        %349 = vset.pattern.permute.xlu0 0
        %350 = vperm.xlu0 %349, %v268
        %v351 = vpop.permute.xlu0 %350
        %v353 = vadd.f32 %v351, %v345
        %v354 = vlaneseq
        %v355 = vand.u32 %v354, 127
        %v356 = vcvt.s32.f32 %v355
        %v357 = vlaneseq
        %v358 = vshrl.u32 %v357, 7
        %v359 = vcvt.s32.f32 %v358
        %s360 = scvt.s32.f32 %s265
        %v361 = vstv %s360
        %v362 = vadd.f32 %v361, %v356
        %v363 = vadd.f32 %v362, 1.0
        %v364 = vsub.f32 %v359, 1.0
        %v365 = vadd.f32 %v363, %v364
        %v366 = vadd.f32 %v365, %v353
        %v367 = vfloor.f32 %v366
        %v368 = vadd.f32 %v367, 1.0
        %v369 = vmax.f32 %v367, 0.0
        %v370 = vmin.f32 %v369, 17.0
        %v371 = vmax.f32 %v368, 0.0
        %v372 = vmin.f32 %v371, 17.0
        %v373 = vmax.f32 %v366, 0.0
        %v374 = vmin.f32 %v373, 17.0
        %v375 = vsub.f32 %v374, %v370
        %v376 = vsub.f32 %v372, %v374
        %v377 = vcvt.f32.s32.to.zero.pseudo %v370
        %v378 = vcvt.f32.s32.to.zero.pseudo %v372
        %v379 = vld [vmem:[%s256] sm:$0xf]
        %v380 = vadd.s32 %v358, 8
        %v381 = vadd.s32 %v358, 16
        %v382 = vadd.s32 %v358, 24
        %v383 = vadd.s32 %v358, 32
        %v384 = vadd.s32 %v358, 40
        %v385 = vadd.s32 %v358, 48
        %v386 = vadd.s32 %v358, 56
        %v387 = vadd.s32 %v358, 64
        %v388 = vadd.s32 %v358, 72
        %v389 = vadd.s32 %v358, 80
        %v390 = vadd.s32 %v358, 88
        %v391 = vadd.s32 %v358, 96
        %v392 = vadd.s32 %v358, 104
        %v393 = vadd.s32 %v358, 112
        %v394 = vadd.s32 %v358, 120
        %v395 = vlaneseq
        %v396 = vshrl.u32 %v395, 7
        %v397 = vsub.s32 0, %v396
        %v398 = vrot.slane %v377, %v397
        %vm399 = vcmp.eq.s32.totalorder %v358, %v398
        %vm400 = vcmp.eq.s32.totalorder %v380, %v398
        %vm401 = vcmp.eq.s32.totalorder %v381, %v398
        %vm402 = vcmp.eq.s32.totalorder %v382, %v398
        %vm403 = vcmp.eq.s32.totalorder %v383, %v398
        %vm404 = vcmp.eq.s32.totalorder %v384, %v398
        %vm405 = vcmp.eq.s32.totalorder %v385, %v398
        %vm406 = vcmp.eq.s32.totalorder %v386, %v398
        %vm407 = vcmp.eq.s32.totalorder %v387, %v398
        %vm408 = vcmp.eq.s32.totalorder %v388, %v398
        %vm409 = vcmp.eq.s32.totalorder %v389, %v398
        %vm410 = vcmp.eq.s32.totalorder %v390, %v398
        %vm411 = vcmp.eq.s32.totalorder %v391, %v398
        %vm412 = vcmp.eq.s32.totalorder %v392, %v398
        %vm413 = vcmp.eq.s32.totalorder %v393, %v398
        %vm414 = vcmp.eq.s32.totalorder %v394, %v398
        %v415 = vlaneseq
        %v416 = vshrl.u32 %v415, 7
        %v417 = vsub.s32 0, %v416
        %v418 = vrot.slane %v378, %v417
        %vm419 = vcmp.eq.s32.totalorder %v358, %v418
        %vm420 = vcmp.eq.s32.totalorder %v380, %v418
        %vm421 = vcmp.eq.s32.totalorder %v381, %v418
        %vm422 = vcmp.eq.s32.totalorder %v382, %v418
        %vm423 = vcmp.eq.s32.totalorder %v383, %v418
        %vm424 = vcmp.eq.s32.totalorder %v384, %v418
        %vm425 = vcmp.eq.s32.totalorder %v385, %v418
        %vm426 = vcmp.eq.s32.totalorder %v386, %v418
        %vm427 = vcmp.eq.s32.totalorder %v387, %v418
        %vm428 = vcmp.eq.s32.totalorder %v388, %v418
        %vm429 = vcmp.eq.s32.totalorder %v389, %v418
        %vm430 = vcmp.eq.s32.totalorder %v390, %v418
        %vm431 = vcmp.eq.s32.totalorder %v391, %v418
        %vm432 = vcmp.eq.s32.totalorder %v392, %v418
        %vm433 = vcmp.eq.s32.totalorder %v393, %v418
        %vm434 = vcmp.eq.s32.totalorder %v394, %v418
        %v435 = vlaneseq
        %v436 = vshrl.u32 %v435, 7
        %v437 = vsub.s32 0, %v436
        %v438 = vrot.slane %v375, %v437
        %v439 = vsel %vm419, %v438, 0.0
        %v440 = vsel %vm420, %v438, 0.0
        %v441 = vsel %vm421, %v438, 0.0
        %v442 = vsel %vm422, %v438, 0.0
        %v443 = vsel %vm423, %v438, 0.0
        %v444 = vsel %vm424, %v438, 0.0
        %v445 = vsel %vm425, %v438, 0.0
        %v446 = vsel %vm426, %v438, 0.0
        %v447 = vsel %vm427, %v438, 0.0
        %v448 = vsel %vm428, %v438, 0.0
        %v449 = vsel %vm429, %v438, 0.0
        %v450 = vsel %vm430, %v438, 0.0
        %v451 = vsel %vm431, %v438, 0.0
        %v452 = vsel %vm432, %v438, 0.0
        %v453 = vsel %vm433, %v438, 0.0
        %v454 = vsel %vm434, %v438, 0.0
        %v455 = vlaneseq
        %v456 = vshrl.u32 %v455, 7
        %v457 = vsub.s32 0, %v456
        %v458 = vrot.slane %v376, %v457
        %v459 = vsel %vm399, %v458, %v439
        %v460 = vsel %vm400, %v458, %v440
        %v461 = vsel %vm401, %v458, %v441
        %v462 = vsel %vm402, %v458, %v442
        %v463 = vsel %vm403, %v458, %v443
        %v464 = vsel %vm404, %v458, %v444
        %v465 = vsel %vm405, %v458, %v445
        %v466 = vsel %vm406, %v458, %v446
        %v467 = vsel %vm407, %v458, %v447
        %v468 = vsel %vm408, %v458, %v448
        %v469 = vsel %vm409, %v458, %v449
        %v470 = vsel %vm410, %v458, %v450
        %v471 = vsel %vm411, %v458, %v451
        %v472 = vsel %vm412, %v458, %v452
        %v473 = vsel %vm413, %v458, %v453
        %v474 = vsel %vm414, %v458, %v454
        %475 = vmatprep.subr.mxu0 0.0
        %476 = vmatpush1.msra.mxu0 %v474
        %477 = vmatprep.subr.mxu0 0.0
        %478 = vmatpush1.msra.mxu0 %v473
        %479 = vmatprep.subr.mxu0 0.0
        %480 = vmatpush1.msra.mxu0 %v472
        %481 = vmatprep.subr.mxu0 0.0
        %482 = vmatpush1.msra.mxu0 %v471
        %483 = vmatprep.subr.mxu0 0.0
        %484 = vmatpush1.msra.mxu0 %v470
        %485 = vmatprep.subr.mxu0 0.0
        %486 = vmatpush1.msra.mxu0 %v469
        %487 = vmatprep.subr.mxu0 0.0
        %488 = vmatpush1.msra.mxu0 %v468
        %489 = vmatprep.subr.mxu0 0.0
        %490 = vmatpush1.msra.mxu0 %v467
        %491 = vmatprep.subr.mxu0 0.0
        %492 = vmatpush1.msra.mxu0 %v466
        %493 = vmatprep.subr.mxu0 0.0
        %494 = vmatpush1.msra.mxu0 %v465
        %495 = vmatprep.subr.mxu0 0.0
        %496 = vmatpush1.msra.mxu0 %v464
        %497 = vmatprep.subr.mxu0 0.0
        %498 = vmatpush1.msra.mxu0 %v463
        %499 = vmatprep.subr.mxu0 0.0
        %500 = vmatpush1.msra.mxu0 %v462
        %501 = vmatprep.subr.mxu0 0.0
        %502 = vmatpush1.msra.mxu0 %v461
        %503 = vmatprep.subr.mxu0 0.0
        %504 = vmatpush1.msra.mxu0 %v460
        %505 = vmatprep.subr.mxu0 0.0
        %506 = vmatpush1.msra.mxu0 %v459
        %507 = vmatprep.subr.mxu0 0.0
        %508 = vmatpush2.msra.mxu0 0.0
        %509 = vmatprep.subr.mxu0 0.0
        %510 = vmatpush2.msra.mxu0 0.0
        %511 = vmatprep.subr.mxu0 0.0
        %512 = vmatpush2.msra.mxu0 0.0
        %513 = vmatprep.subr.mxu0 0.0
        %514 = vmatpush2.msra.mxu0 0.0
        %515 = vmatprep.subr.mxu0 0.0
        %516 = vmatpush2.msra.mxu0 0.0
        %517 = vmatprep.subr.mxu0 0.0
        %518 = vmatpush2.msra.mxu0 0.0
        %519 = vmatprep.subr.mxu0 0.0
        %520 = vmatpush2.msra.mxu0 0.0
        %521 = vmatprep.subr.mxu0 0.0
        %522 = vmatpush2.msra.mxu0 0.0
        %523 = vmatprep.subr.mxu0 0.0
        %524 = vmatpush2.msra.mxu0 0.0
        %525 = vmatprep.subr.mxu0 0.0
        %526 = vmatpush2.msra.mxu0 0.0
        %527 = vmatprep.subr.mxu0 0.0
        %528 = vmatpush2.msra.mxu0 0.0
        %529 = vmatprep.subr.mxu0 0.0
        %530 = vmatpush2.msra.mxu0 0.0
        %531 = vmatprep.subr.mxu0 0.0
        %532 = vmatpush2.msra.mxu0 0.0
        %533 = vmatprep.subr.mxu0 0.0
        %534 = vmatpush2.msra.mxu0 0.0
        %535 = vmatprep.subr.mxu0 0.0
        %536 = vmatpush2.msra.mxu0 0.0
        %537 = vmatprep.subr.mxu0 0.0
        %538 = vmatpush2.msra.mxu0 0.0
        %539 = vmatprep.mubr.f32.mxu0 0.0
        %540 = vmatmul.mubr.f32.gmra.mxu0 %v379
        %v541 = vpop.f32.mrf.mxu0
        %v542 = vadd.f32 0.0, %v541
        %v543 = vpop.f32.mrf.mxu0
        %544 = vdwg.mxu0
        %v545 = vld [vmem:[%s4] sm:$0xff]
        %v546 = vlaneseq
        %v547 = vshrl.u32 %v546, 7
        %v548 = vsub.s32 1, %v547
        %v549 = vrot.slane %v377, %v548
        %vm550 = vcmp.eq.s32.totalorder %v358, %v549
        %vm551 = vcmp.eq.s32.totalorder %v380, %v549
        %vm552 = vcmp.eq.s32.totalorder %v381, %v549
        %vm553 = vcmp.eq.s32.totalorder %v382, %v549
        %vm554 = vcmp.eq.s32.totalorder %v383, %v549
        %vm555 = vcmp.eq.s32.totalorder %v384, %v549
        %vm556 = vcmp.eq.s32.totalorder %v385, %v549
        %vm557 = vcmp.eq.s32.totalorder %v386, %v549
        %vm558 = vcmp.eq.s32.totalorder %v387, %v549
        %vm559 = vcmp.eq.s32.totalorder %v388, %v549
        %vm560 = vcmp.eq.s32.totalorder %v389, %v549
        %vm561 = vcmp.eq.s32.totalorder %v390, %v549
        %vm562 = vcmp.eq.s32.totalorder %v391, %v549
        %vm563 = vcmp.eq.s32.totalorder %v392, %v549
        %vm564 = vcmp.eq.s32.totalorder %v393, %v549
        %vm565 = vcmp.eq.s32.totalorder %v394, %v549
        %v566 = vlaneseq
        %v567 = vshrl.u32 %v566, 7
        %v568 = vsub.s32 1, %v567
        %v569 = vrot.slane %v378, %v568
        %vm570 = vcmp.eq.s32.totalorder %v358, %v569
        %vm571 = vcmp.eq.s32.totalorder %v380, %v569
        %vm572 = vcmp.eq.s32.totalorder %v381, %v569
        %vm573 = vcmp.eq.s32.totalorder %v382, %v569
        %vm574 = vcmp.eq.s32.totalorder %v383, %v569
        %vm575 = vcmp.eq.s32.totalorder %v384, %v569
        %vm576 = vcmp.eq.s32.totalorder %v385, %v569
        %vm577 = vcmp.eq.s32.totalorder %v386, %v569
        %vm578 = vcmp.eq.s32.totalorder %v387, %v569
        %vm579 = vcmp.eq.s32.totalorder %v388, %v569
        %vm580 = vcmp.eq.s32.totalorder %v389, %v569
        %vm581 = vcmp.eq.s32.totalorder %v390, %v569
        %vm582 = vcmp.eq.s32.totalorder %v391, %v569
        %vm583 = vcmp.eq.s32.totalorder %v392, %v569
        %vm584 = vcmp.eq.s32.totalorder %v393, %v569
        %vm585 = vcmp.eq.s32.totalorder %v394, %v569
        %v586 = vlaneseq
        %v587 = vshrl.u32 %v586, 7
        %v588 = vsub.s32 1, %v587
        %v589 = vrot.slane %v375, %v588
        %v590 = vsel %vm570, %v589, 0.0
        %v591 = vsel %vm571, %v589, 0.0
        %v592 = vsel %vm572, %v589, 0.0
        %v593 = vsel %vm573, %v589, 0.0
        %v594 = vsel %vm574, %v589, 0.0
        %v595 = vsel %vm575, %v589, 0.0
        %v596 = vsel %vm576, %v589, 0.0
        %v597 = vsel %vm577, %v589, 0.0
        %v598 = vsel %vm578, %v589, 0.0
        %v599 = vsel %vm579, %v589, 0.0
        %v600 = vsel %vm580, %v589, 0.0
        %v601 = vsel %vm581, %v589, 0.0
        %v602 = vsel %vm582, %v589, 0.0
        %v603 = vsel %vm583, %v589, 0.0
        %v604 = vsel %vm584, %v589, 0.0
        %v605 = vsel %vm585, %v589, 0.0
        %v606 = vlaneseq
        %v607 = vshrl.u32 %v606, 7
        %v608 = vsub.s32 1, %v607
        %v609 = vrot.slane %v376, %v608
        %v610 = vsel %vm550, %v609, %v590
        %v611 = vsel %vm551, %v609, %v591
        %v612 = vsel %vm552, %v609, %v592
        %v613 = vsel %vm553, %v609, %v593
        %v614 = vsel %vm554, %v609, %v594
        %v615 = vsel %vm555, %v609, %v595
        %v616 = vsel %vm556, %v609, %v596
        %v617 = vsel %vm557, %v609, %v597
        %v618 = vsel %vm558, %v609, %v598
        %v619 = vsel %vm559, %v609, %v599
        %v620 = vsel %vm560, %v609, %v600
        %v621 = vsel %vm561, %v609, %v601
        %v622 = vsel %vm562, %v609, %v602
        %v623 = vsel %vm563, %v609, %v603
        %v624 = vsel %vm564, %v609, %v604
        %v625 = vsel %vm565, %v609, %v605
        %626 = vmatprep.subr.mxu0 0.0
        %627 = vmatpush1.msra.mxu0 %v625
        %628 = vmatprep.subr.mxu0 0.0
        %629 = vmatpush1.msra.mxu0 %v624
        %630 = vmatprep.subr.mxu0 0.0
        %631 = vmatpush1.msra.mxu0 %v623
        %632 = vmatprep.subr.mxu0 0.0
        %633 = vmatpush1.msra.mxu0 %v622
        %634 = vmatprep.subr.mxu0 0.0
        %635 = vmatpush1.msra.mxu0 %v621
        %636 = vmatprep.subr.mxu0 0.0
        %637 = vmatpush1.msra.mxu0 %v620
        %638 = vmatprep.subr.mxu0 0.0
        %639 = vmatpush1.msra.mxu0 %v619
        %640 = vmatprep.subr.mxu0 0.0
        %641 = vmatpush1.msra.mxu0 %v618
        %642 = vmatprep.subr.mxu0 0.0
        %643 = vmatpush1.msra.mxu0 %v617
        %644 = vmatprep.subr.mxu0 0.0
        %645 = vmatpush1.msra.mxu0 %v616
        %646 = vmatprep.subr.mxu0 0.0
        %647 = vmatpush1.msra.mxu0 %v615
        %648 = vmatprep.subr.mxu0 0.0
        %649 = vmatpush1.msra.mxu0 %v614
        %650 = vmatprep.subr.mxu0 0.0
        %651 = vmatpush1.msra.mxu0 %v613
        %652 = vmatprep.subr.mxu0 0.0
        %653 = vmatpush1.msra.mxu0 %v612
        %654 = vmatprep.subr.mxu0 0.0
        %655 = vmatpush1.msra.mxu0 %v611
        %656 = vmatprep.subr.mxu0 0.0
        %657 = vmatpush1.msra.mxu0 %v610
        %658 = vmatprep.subr.mxu0 0.0
        %659 = vmatpush2.msra.mxu0 0.0
        %660 = vmatprep.subr.mxu0 0.0
        %661 = vmatpush2.msra.mxu0 0.0
        %662 = vmatprep.subr.mxu0 0.0
        %663 = vmatpush2.msra.mxu0 0.0
        %664 = vmatprep.subr.mxu0 0.0
        %665 = vmatpush2.msra.mxu0 0.0
        %666 = vmatprep.subr.mxu0 0.0
        %667 = vmatpush2.msra.mxu0 0.0
        %668 = vmatprep.subr.mxu0 0.0
        %669 = vmatpush2.msra.mxu0 0.0
        %670 = vmatprep.subr.mxu0 0.0
        %671 = vmatpush2.msra.mxu0 0.0
        %672 = vmatprep.subr.mxu0 0.0
        %673 = vmatpush2.msra.mxu0 0.0
        %674 = vmatprep.subr.mxu0 0.0
        %675 = vmatpush2.msra.mxu0 0.0
        %676 = vmatprep.subr.mxu0 0.0
        %677 = vmatpush2.msra.mxu0 0.0
        %678 = vmatprep.subr.mxu0 0.0
        %679 = vmatpush2.msra.mxu0 0.0
        %680 = vmatprep.subr.mxu0 0.0
        %681 = vmatpush2.msra.mxu0 0.0
        %682 = vmatprep.subr.mxu0 0.0
        %683 = vmatpush2.msra.mxu0 0.0
        %684 = vmatprep.subr.mxu0 0.0
        %685 = vmatpush2.msra.mxu0 0.0
        %686 = vmatprep.subr.mxu0 0.0
        %687 = vmatpush2.msra.mxu0 0.0
        %688 = vmatprep.subr.mxu0 0.0
        %689 = vmatpush2.msra.mxu0 0.0
        %690 = vmatprep.mubr.f32.mxu0 0.0
        %691 = vmatmul.mubr.f32.gmra.mxu0 %v379
        %v692 = vpop.f32.mrf.mxu0
        %v693 = vadd.f32 0.0, %v692
        %v694 = vpop.f32.mrf.mxu0
        %695 = vdwg.mxu0
        %s696 = scalar_lea.vmem %s4, 8
        %v697 = vld [vmem:[%s696] sm:$0xff]
        %vm698 = vcmask 31744
        %v700 = vsel %vm698, %v697, 0
        %v703 = vsel %vm274, %v693, 0
        %705 = vmatprep.subr.mxu0 0.0
        %706 = vmatpush1.msra.mxu0 0.0
        %707 = vmatprep.subr.mxu0 0.0
        %708 = vmatpush1.msra.mxu0 0.0
        %709 = vmatprep.subr.mxu0 0.0
        %710 = vmatpush1.msra.mxu0 0.0
        %711 = vmatprep.subr.mxu0 0.0
        %712 = vmatpush1.msra.mxu0 0.0
        %713 = vmatprep.subr.mxu0 0.0
        %714 = vmatpush1.msra.mxu0 0.0
        %715 = vmatprep.subr.mxu0 0.0
        %716 = vmatpush1.msra.mxu0 0.0
        %717 = vmatprep.subr.mxu0 0.0
        %718 = vmatpush1.msra.mxu0 0.0
        %719 = vmatprep.subr.mxu0 0.0
        %720 = vmatpush1.msra.mxu0 0.0
        %721 = vmatprep.subr.mxu0 0.0
        %722 = vmatpush1.msra.mxu0 0.0
        %723 = vmatprep.subr.mxu0 0.0
        %724 = vmatpush1.msra.mxu0 0.0
        %725 = vmatprep.subr.mxu0 0.0
        %726 = vmatpush1.msra.mxu0 0.0
        %727 = vmatprep.subr.mxu0 0.0
        %728 = vmatpush1.msra.mxu0 0.0
        %729 = vmatprep.subr.mxu0 0.0
        %730 = vmatpush1.msra.mxu0 0.0
        %731 = vmatprep.subr.mxu0 0.0
        %732 = vmatpush1.msra.mxu0 0.0
        %733 = vmatprep.subr.mxu0 0.0
        %734 = vmatpush1.msra.mxu0 0.0
        %735 = vmatprep.subr.mxu0 0.0
        %736 = vmatpush1.msra.mxu0 %v703
        %737 = vmatprep.subr.mxu0 0.0
        %738 = vmatpush2.msra.mxu0 0.0
        %739 = vmatprep.subr.mxu0 0.0
        %740 = vmatpush2.msra.mxu0 0.0
        %741 = vmatprep.subr.mxu0 0.0
        %742 = vmatpush2.msra.mxu0 0.0
        %743 = vmatprep.subr.mxu0 0.0
        %744 = vmatpush2.msra.mxu0 0.0
        %745 = vmatprep.subr.mxu0 0.0
        %746 = vmatpush2.msra.mxu0 0.0
        %747 = vmatprep.subr.mxu0 0.0
        %748 = vmatpush2.msra.mxu0 0.0
        %749 = vmatprep.subr.mxu0 0.0
        %750 = vmatpush2.msra.mxu0 0.0
        %751 = vmatprep.subr.mxu0 0.0
        %752 = vmatpush2.msra.mxu0 0.0
        %753 = vmatprep.subr.mxu0 0.0
        %754 = vmatpush2.msra.mxu0 0.0
        %755 = vmatprep.subr.mxu0 0.0
        %756 = vmatpush2.msra.mxu0 0.0
        %757 = vmatprep.subr.mxu0 0.0
        %758 = vmatpush2.msra.mxu0 0.0
        %759 = vmatprep.subr.mxu0 0.0
        %760 = vmatpush2.msra.mxu0 0.0
        %761 = vmatprep.subr.mxu0 0.0
        %762 = vmatpush2.msra.mxu0 0.0
        %763 = vmatprep.subr.mxu0 0.0
        %764 = vmatpush2.msra.mxu0 0.0
        %765 = vmatprep.subr.mxu0 0.0
        %766 = vmatpush2.msra.mxu0 0.0
        %767 = vmatprep.subr.mxu0 0.0
        %768 = vmatpush2.msra.mxu0 0.0
        %769 = vmatprep.mubr.f32.mxu0 0.0
        %770 = vmatmul.mubr.f32.gmra.mxu0 %v700
        %v771 = vpop.f32.mrf.mxu0
        %v772 = vadd.f32 0.0, %v771
        %v773 = vpop.f32.mrf.mxu0
        %774 = vdwg.mxu0
        %v776 = vsel %vm698, %v545, 0
        %v779 = vsel %vm274, %v542, 0
        %781 = vmatprep.subr.mxu0 0.0
        %782 = vmatpush1.msra.mxu0 0.0
        %783 = vmatprep.subr.mxu0 0.0
        %784 = vmatpush1.msra.mxu0 0.0
        %785 = vmatprep.subr.mxu0 0.0
        %786 = vmatpush1.msra.mxu0 0.0
        %787 = vmatprep.subr.mxu0 0.0
        %788 = vmatpush1.msra.mxu0 0.0
        %789 = vmatprep.subr.mxu0 0.0
        %790 = vmatpush1.msra.mxu0 0.0
        %791 = vmatprep.subr.mxu0 0.0
        %792 = vmatpush1.msra.mxu0 0.0
        %793 = vmatprep.subr.mxu0 0.0
        %794 = vmatpush1.msra.mxu0 0.0
        %795 = vmatprep.subr.mxu0 0.0
        %796 = vmatpush1.msra.mxu0 0.0
        %797 = vmatprep.subr.mxu0 0.0
        %798 = vmatpush1.msra.mxu0 0.0
        %799 = vmatprep.subr.mxu0 0.0
        %800 = vmatpush1.msra.mxu0 0.0
        %801 = vmatprep.subr.mxu0 0.0
        %802 = vmatpush1.msra.mxu0 0.0
        %803 = vmatprep.subr.mxu0 0.0
        %804 = vmatpush1.msra.mxu0 0.0
        %805 = vmatprep.subr.mxu0 0.0
        %806 = vmatpush1.msra.mxu0 0.0
        %807 = vmatprep.subr.mxu0 0.0
        %808 = vmatpush1.msra.mxu0 0.0
        %809 = vmatprep.subr.mxu0 0.0
        %810 = vmatpush1.msra.mxu0 0.0
        %811 = vmatprep.subr.mxu0 0.0
        %812 = vmatpush1.msra.mxu0 %v779
        %813 = vmatprep.subr.mxu0 0.0
        %814 = vmatpush2.msra.mxu0 0.0
        %815 = vmatprep.subr.mxu0 0.0
        %816 = vmatpush2.msra.mxu0 0.0
        %817 = vmatprep.subr.mxu0 0.0
        %818 = vmatpush2.msra.mxu0 0.0
        %819 = vmatprep.subr.mxu0 0.0
        %820 = vmatpush2.msra.mxu0 0.0
        %821 = vmatprep.subr.mxu0 0.0
        %822 = vmatpush2.msra.mxu0 0.0
        %823 = vmatprep.subr.mxu0 0.0
        %824 = vmatpush2.msra.mxu0 0.0
        %825 = vmatprep.subr.mxu0 0.0
        %826 = vmatpush2.msra.mxu0 0.0
        %827 = vmatprep.subr.mxu0 0.0
        %828 = vmatpush2.msra.mxu0 0.0
        %829 = vmatprep.subr.mxu0 0.0
        %830 = vmatpush2.msra.mxu0 0.0
        %831 = vmatprep.subr.mxu0 0.0
        %832 = vmatpush2.msra.mxu0 0.0
        %833 = vmatprep.subr.mxu0 0.0
        %834 = vmatpush2.msra.mxu0 0.0
        %835 = vmatprep.subr.mxu0 0.0
        %836 = vmatpush2.msra.mxu0 0.0
        %837 = vmatprep.subr.mxu0 0.0
        %838 = vmatpush2.msra.mxu0 0.0
        %839 = vmatprep.subr.mxu0 0.0
        %840 = vmatpush2.msra.mxu0 0.0
        %841 = vmatprep.subr.mxu0 0.0
        %842 = vmatpush2.msra.mxu0 0.0
        %843 = vmatprep.subr.mxu0 0.0
        %844 = vmatpush2.msra.mxu0 0.0
        %845 = vmatprep.mubr.f32.mxu0 0.0
        %846 = vmatmul.mubr.f32.gmra.mxu0 %v776
        %v847 = vpop.f32.mrf.mxu0
        %v848 = vadd.f32 %v772, %v847
        %v849 = vpop.f32.mrf.mxu0
        %850 = vdwg.mxu0
        %v851 = vlaneseq
        %v852 = vshrl.u32 %v851, 7
        %v853 = vsub.s32 2, %v852
        %v854 = vrot.slane %v377, %v853
        %vm855 = vcmp.eq.s32.totalorder %v358, %v854
        %vm856 = vcmp.eq.s32.totalorder %v380, %v854
        %vm857 = vcmp.eq.s32.totalorder %v381, %v854
        %vm858 = vcmp.eq.s32.totalorder %v382, %v854
        %vm859 = vcmp.eq.s32.totalorder %v383, %v854
        %vm860 = vcmp.eq.s32.totalorder %v384, %v854
        %vm861 = vcmp.eq.s32.totalorder %v385, %v854
        %vm862 = vcmp.eq.s32.totalorder %v386, %v854
        %vm863 = vcmp.eq.s32.totalorder %v387, %v854
        %vm864 = vcmp.eq.s32.totalorder %v388, %v854
        %vm865 = vcmp.eq.s32.totalorder %v389, %v854
        %vm866 = vcmp.eq.s32.totalorder %v390, %v854
        %vm867 = vcmp.eq.s32.totalorder %v391, %v854
        %vm868 = vcmp.eq.s32.totalorder %v392, %v854
        %vm869 = vcmp.eq.s32.totalorder %v393, %v854
        %vm870 = vcmp.eq.s32.totalorder %v394, %v854
        %v871 = vlaneseq
        %v872 = vshrl.u32 %v871, 7
        %v873 = vsub.s32 2, %v872
        %v874 = vrot.slane %v378, %v873
        %vm875 = vcmp.eq.s32.totalorder %v358, %v874
        %vm876 = vcmp.eq.s32.totalorder %v380, %v874
        %vm877 = vcmp.eq.s32.totalorder %v381, %v874
        %vm878 = vcmp.eq.s32.totalorder %v382, %v874
        %vm879 = vcmp.eq.s32.totalorder %v383, %v874
        %vm880 = vcmp.eq.s32.totalorder %v384, %v874
        %vm881 = vcmp.eq.s32.totalorder %v385, %v874
        %vm882 = vcmp.eq.s32.totalorder %v386, %v874
        %vm883 = vcmp.eq.s32.totalorder %v387, %v874
        %vm884 = vcmp.eq.s32.totalorder %v388, %v874
        %vm885 = vcmp.eq.s32.totalorder %v389, %v874
        %vm886 = vcmp.eq.s32.totalorder %v390, %v874
        %vm887 = vcmp.eq.s32.totalorder %v391, %v874
        %vm888 = vcmp.eq.s32.totalorder %v392, %v874
        %vm889 = vcmp.eq.s32.totalorder %v393, %v874
        %vm890 = vcmp.eq.s32.totalorder %v394, %v874
        %v891 = vlaneseq
        %v892 = vshrl.u32 %v891, 7
        %v893 = vsub.s32 2, %v892
        %v894 = vrot.slane %v375, %v893
        %v895 = vsel %vm875, %v894, 0.0
        %v896 = vsel %vm876, %v894, 0.0
        %v897 = vsel %vm877, %v894, 0.0
        %v898 = vsel %vm878, %v894, 0.0
        %v899 = vsel %vm879, %v894, 0.0
        %v900 = vsel %vm880, %v894, 0.0
        %v901 = vsel %vm881, %v894, 0.0
        %v902 = vsel %vm882, %v894, 0.0
        %v903 = vsel %vm883, %v894, 0.0
        %v904 = vsel %vm884, %v894, 0.0
        %v905 = vsel %vm885, %v894, 0.0
        %v906 = vsel %vm886, %v894, 0.0
        %v907 = vsel %vm887, %v894, 0.0
        %v908 = vsel %vm888, %v894, 0.0
        %v909 = vsel %vm889, %v894, 0.0
        %v910 = vsel %vm890, %v894, 0.0
        %v911 = vlaneseq
        %v912 = vshrl.u32 %v911, 7
        %v913 = vsub.s32 2, %v912
        %v914 = vrot.slane %v376, %v913
        %v915 = vsel %vm855, %v914, %v895
        %v916 = vsel %vm856, %v914, %v896
        %v917 = vsel %vm857, %v914, %v897
        %v918 = vsel %vm858, %v914, %v898
        %v919 = vsel %vm859, %v914, %v899
        %v920 = vsel %vm860, %v914, %v900
        %v921 = vsel %vm861, %v914, %v901
        %v922 = vsel %vm862, %v914, %v902
        %v923 = vsel %vm863, %v914, %v903
        %v924 = vsel %vm864, %v914, %v904
        %v925 = vsel %vm865, %v914, %v905
        %v926 = vsel %vm866, %v914, %v906
        %v927 = vsel %vm867, %v914, %v907
        %v928 = vsel %vm868, %v914, %v908
        %v929 = vsel %vm869, %v914, %v909
        %v930 = vsel %vm870, %v914, %v910
        %931 = vmatprep.subr.mxu0 0.0
        %932 = vmatpush1.msra.mxu0 %v930
        %933 = vmatprep.subr.mxu0 0.0
        %934 = vmatpush1.msra.mxu0 %v929
        %935 = vmatprep.subr.mxu0 0.0
        %936 = vmatpush1.msra.mxu0 %v928
        %937 = vmatprep.subr.mxu0 0.0
        %938 = vmatpush1.msra.mxu0 %v927
        %939 = vmatprep.subr.mxu0 0.0
        %940 = vmatpush1.msra.mxu0 %v926
        %941 = vmatprep.subr.mxu0 0.0
        %942 = vmatpush1.msra.mxu0 %v925
        %943 = vmatprep.subr.mxu0 0.0
        %944 = vmatpush1.msra.mxu0 %v924
        %945 = vmatprep.subr.mxu0 0.0
        %946 = vmatpush1.msra.mxu0 %v923
        %947 = vmatprep.subr.mxu0 0.0
        %948 = vmatpush1.msra.mxu0 %v922
        %949 = vmatprep.subr.mxu0 0.0
        %950 = vmatpush1.msra.mxu0 %v921
        %951 = vmatprep.subr.mxu0 0.0
        %952 = vmatpush1.msra.mxu0 %v920
        %953 = vmatprep.subr.mxu0 0.0
        %954 = vmatpush1.msra.mxu0 %v919
        %955 = vmatprep.subr.mxu0 0.0
        %956 = vmatpush1.msra.mxu0 %v918
        %957 = vmatprep.subr.mxu0 0.0
        %958 = vmatpush1.msra.mxu0 %v917
        %959 = vmatprep.subr.mxu0 0.0
        %960 = vmatpush1.msra.mxu0 %v916
        %961 = vmatprep.subr.mxu0 0.0
        %962 = vmatpush1.msra.mxu0 %v915
        %963 = vmatprep.subr.mxu0 0.0
        %964 = vmatpush2.msra.mxu0 0.0
        %965 = vmatprep.subr.mxu0 0.0
        %966 = vmatpush2.msra.mxu0 0.0
        %967 = vmatprep.subr.mxu0 0.0
        %968 = vmatpush2.msra.mxu0 0.0
        %969 = vmatprep.subr.mxu0 0.0
        %970 = vmatpush2.msra.mxu0 0.0
        %971 = vmatprep.subr.mxu0 0.0
        %972 = vmatpush2.msra.mxu0 0.0
        %973 = vmatprep.subr.mxu0 0.0
        %974 = vmatpush2.msra.mxu0 0.0
        %975 = vmatprep.subr.mxu0 0.0
        %976 = vmatpush2.msra.mxu0 0.0
        %977 = vmatprep.subr.mxu0 0.0
        %978 = vmatpush2.msra.mxu0 0.0
        %979 = vmatprep.subr.mxu0 0.0
        %980 = vmatpush2.msra.mxu0 0.0
        %981 = vmatprep.subr.mxu0 0.0
        %982 = vmatpush2.msra.mxu0 0.0
        %983 = vmatprep.subr.mxu0 0.0
        %984 = vmatpush2.msra.mxu0 0.0
        %985 = vmatprep.subr.mxu0 0.0
        %986 = vmatpush2.msra.mxu0 0.0
        %987 = vmatprep.subr.mxu0 0.0
        %988 = vmatpush2.msra.mxu0 0.0
        %989 = vmatprep.subr.mxu0 0.0
        %990 = vmatpush2.msra.mxu0 0.0
        %991 = vmatprep.subr.mxu0 0.0
        %992 = vmatpush2.msra.mxu0 0.0
        %993 = vmatprep.subr.mxu0 0.0
        %994 = vmatpush2.msra.mxu0 0.0
        %995 = vmatprep.mubr.f32.mxu0 0.0
        %996 = vmatmul.mubr.f32.gmra.mxu0 %v379
        %v997 = vpop.f32.mrf.mxu0
        %v998 = vadd.f32 0.0, %v997
        %v999 = vpop.f32.mrf.mxu0
        %1000 = vdwg.mxu0
        %s1001 = scalar_lea.vmem %s4, 16
        %v1002 = vld [vmem:[%s1001] sm:$0xff]
        %v1004 = vsel %vm698, %v1002, 0
        %v1007 = vsel %vm274, %v998, 0
        %1009 = vmatprep.subr.mxu0 0.0
        %1010 = vmatpush1.msra.mxu0 0.0
        %1011 = vmatprep.subr.mxu0 0.0
        %1012 = vmatpush1.msra.mxu0 0.0
        %1013 = vmatprep.subr.mxu0 0.0
        %1014 = vmatpush1.msra.mxu0 0.0
        %1015 = vmatprep.subr.mxu0 0.0
        %1016 = vmatpush1.msra.mxu0 0.0
        %1017 = vmatprep.subr.mxu0 0.0
        %1018 = vmatpush1.msra.mxu0 0.0
        %1019 = vmatprep.subr.mxu0 0.0
        %1020 = vmatpush1.msra.mxu0 0.0
        %1021 = vmatprep.subr.mxu0 0.0
        %1022 = vmatpush1.msra.mxu0 0.0
        %1023 = vmatprep.subr.mxu0 0.0
        %1024 = vmatpush1.msra.mxu0 0.0
        %1025 = vmatprep.subr.mxu0 0.0
        %1026 = vmatpush1.msra.mxu0 0.0
        %1027 = vmatprep.subr.mxu0 0.0
        %1028 = vmatpush1.msra.mxu0 0.0
        %1029 = vmatprep.subr.mxu0 0.0
        %1030 = vmatpush1.msra.mxu0 0.0
        %1031 = vmatprep.subr.mxu0 0.0
        %1032 = vmatpush1.msra.mxu0 0.0
        %1033 = vmatprep.subr.mxu0 0.0
        %1034 = vmatpush1.msra.mxu0 0.0
        %1035 = vmatprep.subr.mxu0 0.0
        %1036 = vmatpush1.msra.mxu0 0.0
        %1037 = vmatprep.subr.mxu0 0.0
        %1038 = vmatpush1.msra.mxu0 0.0
        %1039 = vmatprep.subr.mxu0 0.0
        %1040 = vmatpush1.msra.mxu0 %v1007
        %1041 = vmatprep.subr.mxu0 0.0
        %1042 = vmatpush2.msra.mxu0 0.0
        %1043 = vmatprep.subr.mxu0 0.0
        %1044 = vmatpush2.msra.mxu0 0.0
        %1045 = vmatprep.subr.mxu0 0.0
        %1046 = vmatpush2.msra.mxu0 0.0
        %1047 = vmatprep.subr.mxu0 0.0
        %1048 = vmatpush2.msra.mxu0 0.0
        %1049 = vmatprep.subr.mxu0 0.0
        %1050 = vmatpush2.msra.mxu0 0.0
        %1051 = vmatprep.subr.mxu0 0.0
        %1052 = vmatpush2.msra.mxu0 0.0
        %1053 = vmatprep.subr.mxu0 0.0
        %1054 = vmatpush2.msra.mxu0 0.0
        %1055 = vmatprep.subr.mxu0 0.0
        %1056 = vmatpush2.msra.mxu0 0.0
        %1057 = vmatprep.subr.mxu0 0.0
        %1058 = vmatpush2.msra.mxu0 0.0
        %1059 = vmatprep.subr.mxu0 0.0
        %1060 = vmatpush2.msra.mxu0 0.0
        %1061 = vmatprep.subr.mxu0 0.0
        %1062 = vmatpush2.msra.mxu0 0.0
        %1063 = vmatprep.subr.mxu0 0.0
        %1064 = vmatpush2.msra.mxu0 0.0
        %1065 = vmatprep.subr.mxu0 0.0
        %1066 = vmatpush2.msra.mxu0 0.0
        %1067 = vmatprep.subr.mxu0 0.0
        %1068 = vmatpush2.msra.mxu0 0.0
        %1069 = vmatprep.subr.mxu0 0.0
        %1070 = vmatpush2.msra.mxu0 0.0
        %1071 = vmatprep.subr.mxu0 0.0
        %1072 = vmatpush2.msra.mxu0 0.0
        %1073 = vmatprep.mubr.f32.mxu0 0.0
        %1074 = vmatmul.mubr.f32.gmra.mxu0 %v1004
        %v1075 = vpop.f32.mrf.mxu0
        %v1076 = vadd.f32 0.0, %v1075
        %v1077 = vpop.f32.mrf.mxu0
        %1078 = vdwg.mxu0
        %v1079 = vadd.f32 %v848, %v1076
        %1080 = vst [vmem:[%s252] sm:$0xff] %v1079
        %s1081 = sand.u32 %s158, 1
        %s1082 = scalar_lea.sflag [#allocation3], %s1081
        %s1083 = sand.u32 %s158, 1
        %s1084 = smul.addr %s1083, 8
        %s1085 = scalar_lea.vmem [#allocation2], %s1084
        // Predicated region
        $region41: #{tpu_custom_call.1} parent=39 // pred_check
          %p1086 = pneg %p168
        $region42: #{tpu_custom_call.1} parent=39 // pred_check_branch
          %1088 = sbr.rel (%p1086) target = $region44
        $region43: #{tpu_custom_call.1} parent=39 // pred_region
          %s1090 = ssub.s32 128, 128
          %1091 = vsyncadd %s1082, %s1090
          %s1092 = sadd.s32 %s24, %s23
          %s1093 = smul.addr %s1092, 128
          %s1094 = scalar_lea.hbm %s5, %s1093
          %s1096 = sshll.u32 %s1085, 4
          %s1097 = int_to_ptr.vmem [resolvable:$true] %s1096
          %1099 = dma.vmem_to_hbm [thread:$0]  %s1097, 128, %s1094, %s1082
        $region44: #{tpu_custom_call.1} parent=39 // pred_fallthru
          _
      $region40: #{tpu_custom_call.1} parent=5 // pred_fallthru
        _
      %p1100 = scmp.le.s32.totalorder 2, %s14
      // Predicated region
      $region45: #{tpu_custom_call.1} parent=5 // pred_check
        %p1101 = pneg %p1100
      $region46: #{tpu_custom_call.1} parent=5 // pred_check_branch
        %1103 = sbr.rel (%p1101) target = $region48
      $region47: #{tpu_custom_call.1} parent=5 // pred_region
        %s1104 = ssub.s32 %s14, 2
        // Predicated region
        $region49: #{tpu_custom_call.1} parent=47 // pred_check
          %p1105 = pneg %p174
        $region50: #{tpu_custom_call.1} parent=47 // pred_check_branch
          %1107 = sbr.rel (%p1105) target = $region52
        $region51: #{tpu_custom_call.1} parent=47 // pred_region
          %s1108 = sand.u32 %s159, 1
          %s1109 = scalar_lea.sflag [#allocation3], %s1108
          %s1110 = sand.u32 %s159, 1
          %s1111 = smul.addr %s1110, 8
          %s1112 = scalar_lea.vmem [#allocation2], %s1111
          %1113 = dma.done %s1109, 128
        $region52: #{tpu_custom_call.1} parent=47 // pred_fallthru
          _
      $region48: #{tpu_custom_call.1} parent=5 // pred_fallthru
        _
    $region6: #{tpu_custom_call.1} parent=1 // loop_footer
      %s18 = sadd.s32 1, %s14
    $region7: #{tpu_custom_call.1} parent=1 // loop_footer_branch
      %13 = sbr.rel target = $region3
    $region8: #{tpu_custom_call.1} parent=1 // loop_exit
      _
    %1114 = vsyncpa [#allocation3], 1
    %s1115 = scalar_lea.sflag [#allocation3], 1
    %1116 = vsyncpa %s1115, 1

</llo_original>
